<compile_context>
chip_gen: v5e
topology: v5e:2x2
jax: 0.10.0
libtpu: 0.0.40
codegen_flags: <defaults>
</compile_context>

<pallas_src>
import numpy as np

import jax
import jax.numpy as jnp
from jax.experimental import pallas as pl
from jax.experimental.pallas import tpu as pltpu


def _round_up(x, m):
    return (x + m - 1) // m * m


def _pick_tile(B, tile_b):
    """Batch tile: multiple of 8 sublanes, big for amortization, but keep the
    grid >= ~8 steps when B allows (>= 2 steps/TC on v7x + DMA overlap)."""
    b8 = _round_up(B, 8)
    tile = min(_round_up(tile_b, 8), b8)
    while tile >= 256 and pl.cdiv(b8, tile) < 8:
        tile //= 2
    return _round_up(tile, 8)


def _rating_encoder_kernel(ux_ref, ix_ref,
                           wu_ref, wi_ref,
                           wfu_ref, wfi_ref,
                           b_ref,
                           out_ref):
    # Packed biases: row 0 = bu, row 1 = bi, row 2 = bf (fp32, broadcast over rows).
    bu = b_ref[0:1, :]
    bi = b_ref[1:2, :]
    bf = b_ref[2:3, :]

    # Net: per-side linear + ReLU. bf16 operands, fp32 accumulation on the MXU.
    user_f = jnp.maximum(
        jnp.dot(ux_ref[...], wu_ref[...], preferred_element_type=jnp.float32) + bu,
        0.0)
    item_f = jnp.maximum(
        jnp.dot(ix_ref[...], wi_ref[...], preferred_element_type=jnp.float32) + bi,
        0.0)

    # FusionLayer: relu(concat([user_f, item_f], -1) @ Wf + bf), computed as a
    # split-Wf sum of two dots -> no [tile, 2*Hp] concat temporary in VMEM.
    cdt = wfu_ref.dtype
    acc = jnp.dot(user_f.astype(cdt), wfu_ref[...],
                  preferred_element_type=jnp.float32)
    acc = acc + jnp.dot(item_f.astype(cdt), wfi_ref[...],
                        preferred_element_type=jnp.float32)
    out_ref[...] = jnp.maximum(acc + bf, 0.0).astype(out_ref.dtype)


def rating_encoder(user_x, item_x, params, *, out_dim=None, tile_b=1024,
                   compute_dtype=jnp.bfloat16, out_dtype=jnp.bfloat16):
    """user_x, item_x: [B, D_in] -> ui_feature_root: [B, out_dim] (out_dtype)."""
    B, d_in = user_x.shape
    Hp = params["wu"].shape[1]
    assert Hp % 128 == 0, "prepare_params() must pad the hidden dim to 128 lanes"

    tile = _pick_tile(B, tile_b)
    Bp = _round_up(B, tile)
    if Bp != B:
        pad = ((0, Bp - B), (0, 0))
        user_x = jnp.pad(user_x, pad)
        item_x = jnp.pad(item_x, pad)
    ux = user_x.astype(compute_dtype)
    ix = item_x.astype(compute_dtype)

    grid = (Bp // tile,)
    act_spec = pl.BlockSpec((tile, d_in), lambda i: (i, 0))
    out_spec = pl.BlockSpec((tile, Hp), lambda i: (i, 0))

    def const(shape):  # same block every grid step -> stays resident in VMEM
        return pl.BlockSpec(shape, lambda i: (0, 0))

    w_isz = np.dtype(compute_dtype).itemsize
    out_isz = np.dtype(out_dtype).itemsize

    # Cost hint for XLA scheduling around the custom call.
    flops = 4 * Bp * d_in * Hp + 4 * Bp * Hp * Hp
    bytes_accessed = (2 * Bp * d_in * w_isz                      # activations in
                      + Bp * Hp * out_isz                        # output
                      + (2 * d_in * Hp + 2 * Hp * Hp) * w_isz    # weights
                      + 3 * Hp * 4)                              # packed biases
    cost = pl.CostEstimate(flops=flops, transcendentals=0,
                           bytes_accessed=bytes_accessed)

    # VMEM budget derived from the actual footprint (double-buffered tiles,
    # resident weights, fp32 temporaries), clamped to 64 MiB (safe on v7x).
    vmem_needed = (
        2 * (2 * tile * d_in * w_isz)                            # ux + ix, 2 bufs each
        + 2 * (tile * Hp * out_isz)                              # out, 2 bufs
        + 2 * ((2 * d_in * Hp + 2 * Hp * Hp) * w_isz + 8 * Hp * 4)  # weights + biases
        + 6 * tile * Hp * 4)                                     # fp32/bf16 temporaries
    vmem_limit = int(min(64 << 20, max(2 * vmem_needed, 8 << 20)))

    out = pl.pallas_call(
        _rating_encoder_kernel,
        out_shape=jax.ShapeDtypeStruct((Bp, Hp), out_dtype),
        grid=grid,
        in_specs=[act_spec, act_spec,
                  const((d_in, Hp)), const((d_in, Hp)),
                  const((Hp, Hp)), const((Hp, Hp)),
                  const((3, Hp))],
        out_specs=out_spec,
        compiler_params=pltpu.CompilerParams(
            dimension_semantics=("parallel",),   # shards batch tiles across TCs on v7x
            vmem_limit_bytes=vmem_limit),
        cost_estimate=cost,
    )(ux, ix,
      params["wu"], params["wi"],
      params["wf_u"], params["wf_i"],
      params["b"])

    if out_dim is None:
        out_dim = Hp
    return out[:B, :out_dim]


def init_params(key, d_in, hidden):
    """Raw fp32, unpadded params (torch-equivalent, weights stored as [in, out])."""
    ks = jax.random.split(key, 6)
    s_in = 1.0 / float(np.sqrt(d_in))
    s_h = 1.0 / float(np.sqrt(2.0 * hidden))
    return {
        "wu": jax.random.uniform(ks[0], (d_in, hidden), jnp.float32, -s_in, s_in),
        "bu": jax.random.uniform(ks[1], (1, hidden), jnp.float32, -s_in, s_in),
        "wi": jax.random.uniform(ks[2], (d_in, hidden), jnp.float32, -s_in, s_in),
        "bi": jax.random.uniform(ks[3], (1, hidden), jnp.float32, -s_in, s_in),
        "wf": jax.random.uniform(ks[4], (2 * hidden, hidden), jnp.float32, -s_h, s_h),
        "bf": jnp.zeros((1, hidden), jnp.float32),
    }


def prepare_params(raw, *, compute_dtype=jnp.bfloat16):
    """Pad the hidden dim to a multiple of 128 (lane-dense), split Wf into its
    user/item halves (removes the in-kernel concat), pack the three biases into
    one (3, Hp) fp32 array, and cast weights to the MXU compute dtype."""
    d_in, hidden = raw["wu"].shape
    Hp = _round_up(hidden, 128)

    def pad_cols(w):
        return jnp.pad(w, ((0, 0), (0, Hp - hidden)))

    def pad_half(w_half):  # [hidden, hidden] -> [Hp, Hp]
        return jnp.pad(w_half, ((0, Hp - hidden), (0, Hp - hidden)))

    biases = jnp.concatenate(
        [pad_cols(raw["bu"]), pad_cols(raw["bi"]), pad_cols(raw["bf"])], axis=0)

    return {
        "wu": pad_cols(raw["wu"]).astype(compute_dtype),
        "wi": pad_cols(raw["wi"]).astype(compute_dtype),
        "wf_u": pad_half(raw["wf"][:hidden]).astype(compute_dtype),
        "wf_i": pad_half(raw["wf"][hidden:]).astype(compute_dtype),
        "b": biases,                              # (3, Hp) fp32
    }


def _reference(user_x, item_x, raw):
    uf = jnp.maximum(user_x @ raw["wu"] + raw["bu"], 0.0)
    itf = jnp.maximum(item_x @ raw["wi"] + raw["bi"], 0.0)
    cat = jnp.concatenate([uf, itf], axis=-1)
    return jnp.maximum(cat @ raw["wf"] + raw["bf"], 0.0)


if __name__ == "__main__":
    D_IN, HIDDEN = 32, 32

    key = jax.random.PRNGKey(0)
    k_u, k_i, k_p, k_u2, k_i2 = jax.random.split(key, 5)
    raw = init_params(k_p, D_IN, HIDDEN)
    params = prepare_params(raw, compute_dtype=jnp.bfloat16)

    # Small-shape test (single grid step).
    B = 8
    user_x = jax.random.normal(k_u, (B, D_IN), jnp.float32)
    item_x = jax.random.normal(k_i, (B, D_IN), jnp.float32)
    out = rating_encoder(user_x, item_x, params, out_dim=HIDDEN)
    jax.block_until_ready(out)
    ref = _reference(user_x, item_x, raw)
    assert out.shape == (B, HIDDEN)
    assert jnp.allclose(out.astype(jnp.float32), ref, atol=5e-2, rtol=5e-2), \
        float(jnp.max(jnp.abs(out.astype(jnp.float32) - ref)))

    # Larger batch: exercises the multi-step, double-buffered, megacore-parallel grid.
    B2 = 2048
    user_x2 = jax.random.normal(k_u2, (B2, D_IN), jnp.float32)
    item_x2 = jax.random.normal(k_i2, (B2, D_IN), jnp.float32)
    out2 = rating_encoder(user_x2, item_x2, params, out_dim=HIDDEN)
    jax.block_until_ready(out2)
    ref2 = _reference(user_x2, item_x2, raw)
    assert out2.shape == (B2, HIDDEN)
    assert jnp.allclose(out2.astype(jnp.float32), ref2, atol=5e-2, rtol=5e-2), \
        float(jnp.max(jnp.abs(out2.astype(jnp.float32) - ref2)))

    print("KERNEL_OK")
</pallas_src>

<mosaic_0001>
module attributes {stable_mosaic.version = 11 : i64} {
  func.func @_rating_encoder_kernel(%arg0: i32, %arg1: memref<8x32xbf16, #tpu.memory_space<vmem>>, %arg2: memref<8x32xbf16, #tpu.memory_space<vmem>>, %arg3: memref<32x128xbf16, #tpu.memory_space<vmem>>, %arg4: memref<32x128xbf16, #tpu.memory_space<vmem>>, %arg5: memref<128x128xbf16, #tpu.memory_space<vmem>>, %arg6: memref<128x128xbf16, #tpu.memory_space<vmem>>, %arg7: memref<3x128xf32, #tpu.memory_space<vmem>>, %arg8: memref<8x128xbf16, #tpu.memory_space<vmem>>) attributes {dimension_semantics = [#tpu.dimension_semantics<parallel>], iteration_bounds = array<i64: 1>, scalar_prefetch = 0 : i64, scratch_operands = 0 : i64, tpu.core_type = #tpu.core_type<tc>, window_params = [{transform_indices = @transform_0, window_bounds = array<i64: 8, 32>}, {transform_indices = @transform_1, window_bounds = array<i64: 8, 32>}, {pipeline_mode = #tpu.pipeline_mode<synchronous>, transform_indices = @transform_2, window_bounds = array<i64: 32, 128>}, {pipeline_mode = #tpu.pipeline_mode<synchronous>, transform_indices = @transform_3, window_bounds = array<i64: 32, 128>}, {pipeline_mode = #tpu.pipeline_mode<synchronous>, transform_indices = @transform_4, window_bounds = array<i64: 128, 128>}, {pipeline_mode = #tpu.pipeline_mode<synchronous>, transform_indices = @transform_5, window_bounds = array<i64: 128, 128>}, {pipeline_mode = #tpu.pipeline_mode<synchronous>, transform_indices = @transform_6, window_bounds = array<i64: 3, 128>}, {transform_indices = @transform_7, window_bounds = array<i64: 8, 128>}]} {
    %c0 = arith.constant 0 : index
    %c0_0 = arith.constant 0 : index
    %0 = vector.load %arg7[%c0, %c0_0] : memref<3x128xf32, #tpu.memory_space<vmem>>, vector<1x128xf32>
    %c1 = arith.constant 1 : index
    %c0_1 = arith.constant 0 : index
    %1 = vector.load %arg7[%c1, %c0_1] : memref<3x128xf32, #tpu.memory_space<vmem>>, vector<1x128xf32>
    %c2 = arith.constant 2 : index
    %c0_2 = arith.constant 0 : index
    %2 = vector.load %arg7[%c2, %c0_2] : memref<3x128xf32, #tpu.memory_space<vmem>>, vector<1x128xf32>
    %c0_3 = arith.constant 0 : index
    %c0_4 = arith.constant 0 : index
    %3 = vector.load %arg1[%c0_3, %c0_4] : memref<8x32xbf16, #tpu.memory_space<vmem>>, vector<8x32xbf16>
    %c0_5 = arith.constant 0 : index
    %c0_6 = arith.constant 0 : index
    %4 = vector.load %arg3[%c0_5, %c0_6] : memref<32x128xbf16, #tpu.memory_space<vmem>>, vector<32x128xbf16>
    %cst = arith.constant dense<0.000000e+00> : vector<8x128xf32>
    %5 = tpu.matmul %3, %4, %cst {dimension_numbers = #tpu.dot_dimension_numbers<[1], [0], [0], [1], [0, 0, 1, 1], [], []>} : vector<8x32xbf16>, vector<32x128xbf16>, vector<8x128xf32> -> vector<8x128xf32>
    %6 = vector.broadcast %0 : vector<1x128xf32> to vector<8x128xf32>
    %7 = arith.addf %5, %6 : vector<8x128xf32>
    %cst_7 = arith.constant 0.000000e+00 : f32
    %8 = vector.broadcast %cst_7 : f32 to vector<8x128xf32>
    %9 = arith.maximumf %7, %8 : vector<8x128xf32>
    %c0_8 = arith.constant 0 : index
    %c0_9 = arith.constant 0 : index
    %10 = vector.load %arg2[%c0_8, %c0_9] : memref<8x32xbf16, #tpu.memory_space<vmem>>, vector<8x32xbf16>
    %c0_10 = arith.constant 0 : index
    %c0_11 = arith.constant 0 : index
    %11 = vector.load %arg4[%c0_10, %c0_11] : memref<32x128xbf16, #tpu.memory_space<vmem>>, vector<32x128xbf16>
    %cst_12 = arith.constant dense<0.000000e+00> : vector<8x128xf32>
    %12 = tpu.matmul %10, %11, %cst_12 {dimension_numbers = #tpu.dot_dimension_numbers<[1], [0], [0], [1], [0, 0, 1, 1], [], []>} : vector<8x32xbf16>, vector<32x128xbf16>, vector<8x128xf32> -> vector<8x128xf32>
    %13 = vector.broadcast %1 : vector<1x128xf32> to vector<8x128xf32>
    %14 = arith.addf %12, %13 : vector<8x128xf32>
    %cst_13 = arith.constant 0.000000e+00 : f32
    %15 = vector.broadcast %cst_13 : f32 to vector<8x128xf32>
    %16 = arith.maximumf %14, %15 : vector<8x128xf32>
    %17 = arith.truncf %9 : vector<8x128xf32> to vector<8x128xbf16>
    %c0_14 = arith.constant 0 : index
    %c0_15 = arith.constant 0 : index
    %18 = vector.load %arg5[%c0_14, %c0_15] : memref<128x128xbf16, #tpu.memory_space<vmem>>, vector<128x128xbf16>
    %cst_16 = arith.constant dense<0.000000e+00> : vector<8x128xf32>
    %19 = tpu.matmul %17, %18, %cst_16 {dimension_numbers = #tpu.dot_dimension_numbers<[1], [0], [0], [1], [0, 0, 1, 1], [], []>} : vector<8x128xbf16>, vector<128x128xbf16>, vector<8x128xf32> -> vector<8x128xf32>
    %20 = arith.truncf %16 : vector<8x128xf32> to vector<8x128xbf16>
    %c0_17 = arith.constant 0 : index
    %c0_18 = arith.constant 0 : index
    %21 = vector.load %arg6[%c0_17, %c0_18] : memref<128x128xbf16, #tpu.memory_space<vmem>>, vector<128x128xbf16>
    %cst_19 = arith.constant dense<0.000000e+00> : vector<8x128xf32>
    %22 = tpu.matmul %20, %21, %cst_19 {dimension_numbers = #tpu.dot_dimension_numbers<[1], [0], [0], [1], [0, 0, 1, 1], [], []>} : vector<8x128xbf16>, vector<128x128xbf16>, vector<8x128xf32> -> vector<8x128xf32>
    %23 = arith.addf %19, %22 : vector<8x128xf32>
    %24 = vector.broadcast %2 : vector<1x128xf32> to vector<8x128xf32>
    %25 = arith.addf %23, %24 : vector<8x128xf32>
    %cst_20 = arith.constant 0.000000e+00 : f32
    %26 = vector.broadcast %cst_20 : f32 to vector<8x128xf32>
    %27 = arith.maximumf %25, %26 : vector<8x128xf32>
    %28 = arith.truncf %27 : vector<8x128xf32> to vector<8x128xbf16>
    %c0_21 = arith.constant 0 : index
    %c0_22 = arith.constant 0 : index
    %29 = vector.load %arg8[%c0_21, %c0_22] : memref<8x128xbf16, #tpu.memory_space<vmem>>, vector<8x128xbf16>
    tpu.vector_store %arg8[%c0_21, %c0_22], %28 {strides = array<i32>} : memref<8x128xbf16, #tpu.memory_space<vmem>>, vector<8x128xbf16>,
    return
  }
  func.func @transform_0(%arg0: i32) -> (i32, i32) {
    %c0_i32 = arith.constant 0 : i32
    %c0_i32_0 = arith.constant 0 : i32
    return %arg0, %c0_i32 : i32, i32
  }
  func.func @transform_1(%arg0: i32) -> (i32, i32) {
    %c0_i32 = arith.constant 0 : i32
    %c0_i32_0 = arith.constant 0 : i32
    return %arg0, %c0_i32 : i32, i32
  }
  func.func @transform_2(%arg0: i32) -> (i32, i32) {
    %c0_i32 = arith.constant 0 : i32
    %c0_i32_0 = arith.constant 0 : i32
    %c0_i32_1 = arith.constant 0 : i32
    return %c0_i32, %c0_i32_0 : i32, i32
  }
  func.func @transform_3(%arg0: i32) -> (i32, i32) {
    %c0_i32 = arith.constant 0 : i32
    %c0_i32_0 = arith.constant 0 : i32
    %c0_i32_1 = arith.constant 0 : i32
    return %c0_i32, %c0_i32_0 : i32, i32
  }
  func.func @transform_4(%arg0: i32) -> (i32, i32) {
    %c0_i32 = arith.constant 0 : i32
    %c0_i32_0 = arith.constant 0 : i32
    %c0_i32_1 = arith.constant 0 : i32
    return %c0_i32, %c0_i32_0 : i32, i32
  }
  func.func @transform_5(%arg0: i32) -> (i32, i32) {
    %c0_i32 = arith.constant 0 : i32
    %c0_i32_0 = arith.constant 0 : i32
    %c0_i32_1 = arith.constant 0 : i32
    return %c0_i32, %c0_i32_0 : i32, i32
  }
  func.func @transform_6(%arg0: i32) -> (i32, i32) {
    %c0_i32 = arith.constant 0 : i32
    %c0_i32_0 = arith.constant 0 : i32
    %c0_i32_1 = arith.constant 0 : i32
    return %c0_i32, %c0_i32_0 : i32, i32
  }
  func.func @transform_7(%arg0: i32) -> (i32, i32) {
    %c0_i32 = arith.constant 0 : i32
    %c0_i32_0 = arith.constant 0 : i32
    return %arg0, %c0_i32 : i32, i32
  }
}

</mosaic_0001>

<llo_original>
// kernel: tpu_custom_call.1
$region0: #{tpu_custom_call.1}
  #allocation0 [shape = 'u32[]', space=smem, size = 0x4, offset = 0x4, fixed_abs, tag = 'smem constant byte address 0x4 - core index']
  #allocation1 [shape = 'u32[72,128]{1,0:T(1,128)}', space=vmem, size = 0x9000, scoped, tag = 'internal scratch']
  %s0 = inlined_call_operand.hbm [shape: bf16[8,32], index: 0, kind: input, shape index: {}]
  %s1 = inlined_call_operand.hbm [shape: bf16[8,32], index: 1, kind: input, shape index: {}]
  %s2 = inlined_call_operand.hbm [shape: bf16[32,128], index: 2, kind: input, shape index: {}]
  %s3 = inlined_call_operand.hbm [shape: bf16[32,128], index: 3, kind: input, shape index: {}]
  %s4 = inlined_call_operand.hbm [shape: bf16[128,128], index: 4, kind: input, shape index: {}]
  %s5 = inlined_call_operand.hbm [shape: bf16[128,128], index: 5, kind: input, shape index: {}]
  %s6 = inlined_call_operand.vmem [shape: f32[3,128], index: 6, kind: input, shape index: {}]
  %s7 = inlined_call_operand.hbm [shape: bf16[8,128], index: 7, kind: output, shape index: {}]
  %s8 = sld [smem:[#allocation0]]
  $region62: #{tpu_custom_call.1} parent=0
    _
  %s10 = ssub.s32 1, %s8
  %s11 = scalar_select 0, %s10, %s8
  $region1: #{tpu_custom_call.1} parent=0
    #allocation2 [shape = 'u8[2048]{0}', space=vmem, size = 0x800, scoped, tag = 'input window, operand 0, single buffered']
    #allocation3 [shape = 's32[1]{0}', space=sflag, size = 0x4, scoped, tag = 'scoped memory for tpu_custom_call.1']
    #allocation4 [shape = 's32[1]{0}', space=sflag, size = 0x4, scoped, tag = 'scoped memory for tpu_custom_call.1']
    #allocation5 [shape = 'u8[2048]{0}', space=vmem, size = 0x800, scoped, tag = 'input window, operand 1, single buffered']
    #allocation6 [shape = 's32[1]{0}', space=sflag, size = 0x4, scoped, tag = 'scoped memory for tpu_custom_call.1']
    #allocation7 [shape = 'u8[8192]{0}', space=vmem, size = 0x2000, scoped, tag = 'input window, operand 2, single buffered']
    #allocation8 [shape = 'u8[8192]{0}', space=vmem, size = 0x2000, scoped, tag = 'input window, operand 3, single buffered']
    #allocation9 [shape = 's32[1]{0}', space=sflag, size = 0x4, scoped, tag = 'scoped memory for tpu_custom_call.1']
    #allocation10 [shape = 'u8[32768]{0}', space=vmem, size = 0x8000, scoped, tag = 'input window, operand 4, single buffered']
    #allocation11 [shape = 'u8[32768]{0}', space=vmem, size = 0x8000, scoped, tag = 'input window, operand 5, single buffered']
    #allocation12 [shape = 's32[1]{0}', space=sflag, size = 0x4, scoped, tag = 'scoped memory for tpu_custom_call.1']
    #allocation13 [shape = 'u8[2048]{0}', space=vmem, size = 0x800, scoped, tag = 'output window, operand 0, single buffered']
    %12 = vsyncpa [#allocation3], 0
    %13 = vsyncpa [#allocation6], 0
    %14 = vsyncpa [#allocation9], 0
    %15 = vsyncpa [#allocation12], 0
    %16 = vsyncpa [#allocation4], 0
    // Predicated region
    $region2: #{tpu_custom_call.1} parent=1 // pred_check
      _
    $region3: #{tpu_custom_call.1} parent=1 // pred_check_branch
      %18 = sbr.rel (0) target = $region5
    $region4: #{tpu_custom_call.1} parent=1 // pred_region
      %20 = vsyncadd [#allocation3], 0
      %s22 = sshll.u32 %s0, 4
      %s23 = int_to_ptr.hbm [resolvable:$true] %s22
      %s24 = sshll.u32 [#allocation2], 4
      %s25 = int_to_ptr.vmem [resolvable:$true] %s24
      %27 = dma.hbm_to_vmem [thread:$0]  %s23, 64, %s25, [#allocation3]
    $region5: #{tpu_custom_call.1} parent=1 // pred_fallthru
      _
    // Predicated region
    $region6: #{tpu_custom_call.1} parent=1 // pred_check
      _
    $region7: #{tpu_custom_call.1} parent=1 // pred_check_branch
      %29 = sbr.rel (0) target = $region9
    $region8: #{tpu_custom_call.1} parent=1 // pred_region
      %31 = vsyncadd [#allocation6], 0
      %s33 = sshll.u32 %s1, 4
      %s34 = int_to_ptr.hbm [resolvable:$true] %s33
      %s35 = sshll.u32 [#allocation5], 4
      %s36 = int_to_ptr.vmem [resolvable:$true] %s35
      %38 = dma.hbm_to_vmem [thread:$0]  %s34, 64, %s36, [#allocation6]
    $region9: #{tpu_custom_call.1} parent=1 // pred_fallthru
      _
    // Predicated region
    $region10: #{tpu_custom_call.1} parent=1 // pred_check
      _
    $region11: #{tpu_custom_call.1} parent=1 // pred_check_branch
      %40 = sbr.rel (0) target = $region13
    $region12: #{tpu_custom_call.1} parent=1 // pred_region
      %42 = vsyncadd [#allocation6], 0
      %s43 = sshll.u32 %s2, 4
      %s44 = int_to_ptr.hbm [resolvable:$true] %s43
      %s45 = sshll.u32 [#allocation7], 4
      %s46 = int_to_ptr.vmem [resolvable:$true] %s45
      %51 = dma.hbm_to_vmem [thread:$0]  %s44, 256, %s46, [#allocation6], 64, 64, 4
    $region13: #{tpu_custom_call.1} parent=1 // pred_fallthru
      _
    // Predicated region
    $region14: #{tpu_custom_call.1} parent=1 // pred_check
      _
    $region15: #{tpu_custom_call.1} parent=1 // pred_check_branch
      %53 = sbr.rel (0) target = $region17
    $region16: #{tpu_custom_call.1} parent=1 // pred_region
      %55 = vsyncadd [#allocation9], 0
      %s56 = sshll.u32 %s3, 4
      %s57 = int_to_ptr.hbm [resolvable:$true] %s56
      %s58 = sshll.u32 [#allocation8], 4
      %s59 = int_to_ptr.vmem [resolvable:$true] %s58
      %64 = dma.hbm_to_vmem [thread:$0]  %s57, 256, %s59, [#allocation9], 64, 64, 4
    $region17: #{tpu_custom_call.1} parent=1 // pred_fallthru
      _
    // Predicated region
    $region18: #{tpu_custom_call.1} parent=1 // pred_check
      _
    $region19: #{tpu_custom_call.1} parent=1 // pred_check_branch
      %66 = sbr.rel (0) target = $region21
    $region20: #{tpu_custom_call.1} parent=1 // pred_region
      %68 = vsyncadd [#allocation9], 0
      %s69 = sshll.u32 %s4, 4
      %s70 = int_to_ptr.hbm [resolvable:$true] %s69
      %s71 = sshll.u32 [#allocation10], 4
      %s72 = int_to_ptr.vmem [resolvable:$true] %s71
      %77 = dma.hbm_to_vmem [thread:$0]  %s70, 1024, %s72, [#allocation9], 64, 64, 4
    $region21: #{tpu_custom_call.1} parent=1 // pred_fallthru
      _
    // Predicated region
    $region22: #{tpu_custom_call.1} parent=1 // pred_check
      _
    $region23: #{tpu_custom_call.1} parent=1 // pred_check_branch
      %79 = sbr.rel (0) target = $region25
    $region24: #{tpu_custom_call.1} parent=1 // pred_region
      %81 = vsyncadd [#allocation12], 0
      %s82 = sshll.u32 %s5, 4
      %s83 = int_to_ptr.hbm [resolvable:$true] %s82
      %s84 = sshll.u32 [#allocation11], 4
      %s85 = int_to_ptr.vmem [resolvable:$true] %s84
      %90 = dma.hbm_to_vmem [thread:$0]  %s83, 1024, %s85, [#allocation12], 64, 64, 4
    $region25: #{tpu_custom_call.1} parent=1 // pred_fallthru
      _
    // Predicated region
    $region26: #{tpu_custom_call.1} parent=1 // pred_check
      _
    $region27: #{tpu_custom_call.1} parent=1 // pred_check_branch
      %92 = sbr.rel (0) target = $region29
    $region28: #{tpu_custom_call.1} parent=1 // pred_region
      _
    $region29: #{tpu_custom_call.1} parent=1 // pred_fallthru
      _
    // Predicated region
    $region30: #{tpu_custom_call.1} parent=1 // pred_check
      _
    $region31: #{tpu_custom_call.1} parent=1 // pred_check_branch
      %94 = sbr.rel (0) target = $region33
    $region32: #{tpu_custom_call.1} parent=1 // pred_region
      %96 = dma.done [#allocation3], 64
    $region33: #{tpu_custom_call.1} parent=1 // pred_fallthru
      _
    // Predicated region
    $region34: #{tpu_custom_call.1} parent=1 // pred_check
      _
    $region35: #{tpu_custom_call.1} parent=1 // pred_check_branch
      %98 = sbr.rel (0) target = $region37
    $region36: #{tpu_custom_call.1} parent=1 // pred_region
      %100 = dma.done [#allocation6], 64
    $region37: #{tpu_custom_call.1} parent=1 // pred_fallthru
      _
    // Predicated region
    $region38: #{tpu_custom_call.1} parent=1 // pred_check
      _
    $region39: #{tpu_custom_call.1} parent=1 // pred_check_branch
      %102 = sbr.rel (0) target = $region41
    $region40: #{tpu_custom_call.1} parent=1 // pred_region
      %104 = dma.done [#allocation6], 256
    $region41: #{tpu_custom_call.1} parent=1 // pred_fallthru
      _
    // Predicated region
    $region42: #{tpu_custom_call.1} parent=1 // pred_check
      _
    $region43: #{tpu_custom_call.1} parent=1 // pred_check_branch
      %106 = sbr.rel (0) target = $region45
    $region44: #{tpu_custom_call.1} parent=1 // pred_region
      %108 = dma.done [#allocation9], 256
    $region45: #{tpu_custom_call.1} parent=1 // pred_fallthru
      _
    // Predicated region
    $region46: #{tpu_custom_call.1} parent=1 // pred_check
      _
    $region47: #{tpu_custom_call.1} parent=1 // pred_check_branch
      %110 = sbr.rel (0) target = $region49
    $region48: #{tpu_custom_call.1} parent=1 // pred_region
      %112 = dma.done [#allocation9], 1024
    $region49: #{tpu_custom_call.1} parent=1 // pred_fallthru
      _
    // Predicated region
    $region50: #{tpu_custom_call.1} parent=1 // pred_check
      _
    $region51: #{tpu_custom_call.1} parent=1 // pred_check_branch
      %114 = sbr.rel (0) target = $region53
    $region52: #{tpu_custom_call.1} parent=1 // pred_region
      %116 = dma.done [#allocation12], 1024
    $region53: #{tpu_custom_call.1} parent=1 // pred_fallthru
      _
    %v118 = vld [vmem:[%s6] sm:$0x1]
    %v119 = vld [vmem:[%s6 + $0x1] sm:$0x1]
    %v120 = vld [vmem:[%s6 + $0x2] sm:$0x1]
    %v121 = vld [vmem:[#allocation2] sm:$0xf]
    %v122 = vld [vmem:[#allocation7] sm:$0xf]
    %v123 = vld [vmem:[#allocation7 + $0x4] sm:$0xf]
    %v124 = vld [vmem:[#allocation7 + $0x8] sm:$0xf]
    %v125 = vld [vmem:[#allocation7 + $0xc] sm:$0xf]
    %v126 = vperm.slane %v118, 0
    %v131 = vunpack.c.l.b16 %v122
    %v132 = vunpack.c.l.b16 %v123
    %v133 = vunpack.c.l.b16 %v124
    %v134 = vunpack.c.l.b16 %v125
    %v135 = vpack.c.b16 %v132, %v131
    %v136 = vpack.c.b16 %v134, %v133
    %vm139 = vcmask 261120
    %v141 = vsel %vm139, %v121, 0
    %143 = vmatpush.bf16.msra.mxu0 0
    %144 = vmatpush.bf16.msra.mxu0 0
    %145 = vmatpush.bf16.msra.mxu0 0
    %146 = vmatpush.bf16.msra.mxu0 0
    %147 = vmatpush.bf16.msra.mxu0 0
    %148 = vmatpush.bf16.msra.mxu0 0
    %149 = vmatpush.bf16.msra.mxu0 %v136
    %150 = vmatpush.bf16.msra.mxu0 %v135
    %151 = vmatmul.bf16.gmra.mxu0 %v141
    %v152 = vpop.f32.mrf.mxu0
    %v153 = vadd.f32 %v126, %v152
    %v154 = vpop.f32.mrf.mxu0
    %155 = vdwg.mxu0
    %v156 = vmax.f32 %v153, 0.0
    %v157 = vld [vmem:[#allocation5] sm:$0xf]
    %v158 = vld [vmem:[#allocation8] sm:$0xf]
    %v159 = vld [vmem:[#allocation8 + $0x4] sm:$0xf]
    %v160 = vld [vmem:[#allocation8 + $0x8] sm:$0xf]
    %v161 = vld [vmem:[#allocation8 + $0xc] sm:$0xf]
    %v162 = vperm.slane %v119, 0
    %v167 = vunpack.c.l.b16 %v158
    %v168 = vunpack.c.l.b16 %v159
    %v169 = vunpack.c.l.b16 %v160
    %v170 = vunpack.c.l.b16 %v161
    %v171 = vpack.c.b16 %v168, %v167
    %v172 = vpack.c.b16 %v170, %v169
    %v176 = vsel %vm139, %v157, 0
    %178 = vmatpush.bf16.msra.mxu0 0
    %179 = vmatpush.bf16.msra.mxu0 0
    %180 = vmatpush.bf16.msra.mxu0 0
    %181 = vmatpush.bf16.msra.mxu0 0
    %182 = vmatpush.bf16.msra.mxu0 0
    %183 = vmatpush.bf16.msra.mxu0 0
    %184 = vmatpush.bf16.msra.mxu0 %v172
    %185 = vmatpush.bf16.msra.mxu0 %v171
    %186 = vmatmul.bf16.gmra.mxu0 %v176
    %v187 = vpop.f32.mrf.mxu0
    %v188 = vadd.f32 %v162, %v187
    %v189 = vpop.f32.mrf.mxu0
    %190 = vdwg.mxu0
    %v191 = vmax.f32 %v188, 0.0
    %v192 = vpack.c.bf16 %v156, %v156
    %v193 = vld [vmem:[#allocation10] sm:$0xf]
    %v194 = vld [vmem:[#allocation10 + $0x4] sm:$0xf]
    %v195 = vld [vmem:[#allocation10 + $0x8] sm:$0xf]
    %v196 = vld [vmem:[#allocation10 + $0xc] sm:$0xf]
    %v197 = vld [vmem:[#allocation10 + $0x10] sm:$0xf]
    %v198 = vld [vmem:[#allocation10 + $0x14] sm:$0xf]
    %v199 = vld [vmem:[#allocation10 + $0x18] sm:$0xf]
    %v200 = vld [vmem:[#allocation10 + $0x1c] sm:$0xf]
    %v201 = vld [vmem:[#allocation10 + $0x20] sm:$0xf]
    %v202 = vld [vmem:[#allocation10 + $0x24] sm:$0xf]
    %v203 = vld [vmem:[#allocation10 + $0x28] sm:$0xf]
    %v204 = vld [vmem:[#allocation10 + $0x2c] sm:$0xf]
    %v205 = vld [vmem:[#allocation10 + $0x30] sm:$0xf]
    %v206 = vld [vmem:[#allocation10 + $0x34] sm:$0xf]
    %v207 = vld [vmem:[#allocation10 + $0x38] sm:$0xf]
    %v208 = vld [vmem:[#allocation10 + $0x3c] sm:$0xf]
    %v209 = vpack.c.bf16 %v191, %v191
    %v210 = vld [vmem:[#allocation11] sm:$0xf]
    %v211 = vld [vmem:[#allocation11 + $0x4] sm:$0xf]
    %v212 = vld [vmem:[#allocation11 + $0x8] sm:$0xf]
    %v213 = vld [vmem:[#allocation11 + $0xc] sm:$0xf]
    %v214 = vld [vmem:[#allocation11 + $0x10] sm:$0xf]
    %v215 = vld [vmem:[#allocation11 + $0x14] sm:$0xf]
    %v216 = vld [vmem:[#allocation11 + $0x18] sm:$0xf]
    %v217 = vld [vmem:[#allocation11 + $0x1c] sm:$0xf]
    %v218 = vld [vmem:[#allocation11 + $0x20] sm:$0xf]
    %v219 = vld [vmem:[#allocation11 + $0x24] sm:$0xf]
    %v220 = vld [vmem:[#allocation11 + $0x28] sm:$0xf]
    %v221 = vld [vmem:[#allocation11 + $0x2c] sm:$0xf]
    %v222 = vld [vmem:[#allocation11 + $0x30] sm:$0xf]
    %v223 = vld [vmem:[#allocation11 + $0x34] sm:$0xf]
    %v224 = vld [vmem:[#allocation11 + $0x38] sm:$0xf]
    %v225 = vld [vmem:[#allocation11 + $0x3c] sm:$0xf]
    %v242 = vunpack.c.l.b16 %v210
    %v243 = vunpack.c.l.b16 %v211
    %v244 = vunpack.c.l.b16 %v212
    %v245 = vunpack.c.l.b16 %v213
    %v246 = vunpack.c.l.b16 %v214
    %v247 = vunpack.c.l.b16 %v215
    %v248 = vunpack.c.l.b16 %v216
    %v249 = vunpack.c.l.b16 %v217
    %v250 = vunpack.c.l.b16 %v218
    %v251 = vunpack.c.l.b16 %v219
    %v252 = vunpack.c.l.b16 %v220
    %v253 = vunpack.c.l.b16 %v221
    %v254 = vunpack.c.l.b16 %v222
    %v255 = vunpack.c.l.b16 %v223
    %v256 = vunpack.c.l.b16 %v224
    %v257 = vunpack.c.l.b16 %v225
    %v258 = vpack.c.b16 %v243, %v242
    %v259 = vpack.c.b16 %v245, %v244
    %v260 = vpack.c.b16 %v247, %v246
    %v261 = vpack.c.b16 %v249, %v248
    %v262 = vpack.c.b16 %v251, %v250
    %v263 = vpack.c.b16 %v253, %v252
    %v264 = vpack.c.b16 %v255, %v254
    %v265 = vpack.c.b16 %v257, %v256
    %274 = vmatpush.bf16.msra.mxu0 %v265
    %275 = vmatpush.bf16.msra.mxu0 %v264
    %276 = vmatpush.bf16.msra.mxu0 %v263
    %277 = vmatpush.bf16.msra.mxu0 %v262
    %278 = vmatpush.bf16.msra.mxu0 %v261
    %279 = vmatpush.bf16.msra.mxu0 %v260
    %280 = vmatpush.bf16.msra.mxu0 %v259
    %281 = vmatpush.bf16.msra.mxu0 %v258
    %282 = vmatmul.bf16.gmra.mxu0 %v209
    %v283 = vpop.f32.mrf.mxu0
    %v284 = vadd.f32 0.0, %v283
    %v285 = vpop.f32.mrf.mxu0
    %286 = vdwg.mxu0
    %v303 = vunpack.c.l.b16 %v193
    %v304 = vunpack.c.l.b16 %v194
    %v305 = vunpack.c.l.b16 %v195
    %v306 = vunpack.c.l.b16 %v196
    %v307 = vunpack.c.l.b16 %v197
    %v308 = vunpack.c.l.b16 %v198
    %v309 = vunpack.c.l.b16 %v199
    %v310 = vunpack.c.l.b16 %v200
    %v311 = vunpack.c.l.b16 %v201
    %v312 = vunpack.c.l.b16 %v202
    %v313 = vunpack.c.l.b16 %v203
    %v314 = vunpack.c.l.b16 %v204
    %v315 = vunpack.c.l.b16 %v205
    %v316 = vunpack.c.l.b16 %v206
    %v317 = vunpack.c.l.b16 %v207
    %v318 = vunpack.c.l.b16 %v208
    %v319 = vpack.c.b16 %v304, %v303
    %v320 = vpack.c.b16 %v306, %v305
    %v321 = vpack.c.b16 %v308, %v307
    %v322 = vpack.c.b16 %v310, %v309
    %v323 = vpack.c.b16 %v312, %v311
    %v324 = vpack.c.b16 %v314, %v313
    %v325 = vpack.c.b16 %v316, %v315
    %v326 = vpack.c.b16 %v318, %v317
    %335 = vmatpush.bf16.msra.mxu0 %v326
    %336 = vmatpush.bf16.msra.mxu0 %v325
    %337 = vmatpush.bf16.msra.mxu0 %v324
    %338 = vmatpush.bf16.msra.mxu0 %v323
    %339 = vmatpush.bf16.msra.mxu0 %v322
    %340 = vmatpush.bf16.msra.mxu0 %v321
    %341 = vmatpush.bf16.msra.mxu0 %v320
    %342 = vmatpush.bf16.msra.mxu0 %v319
    %343 = vmatmul.bf16.gmra.mxu0 %v192
    %v344 = vpop.f32.mrf.mxu0
    %v345 = vadd.f32 %v284, %v344
    %v346 = vpop.f32.mrf.mxu0
    %347 = vdwg.mxu0
    %v348 = vperm.slane %v120, 0
    %v349 = vadd.f32 %v345, %v348
    %v350 = vmax.f32 %v349, 0.0
    %v351 = vpack.c.bf16 %v350, %v350
    %352 = vst [vmem:[#allocation13] sm:$0xf] %v351
    // Predicated region
    $region54: #{tpu_custom_call.1} parent=1 // pred_check
      _
    $region55: #{tpu_custom_call.1} parent=1 // pred_check_branch
      %354 = sbr.rel (0) target = $region57
    $region56: #{tpu_custom_call.1} parent=1 // pred_region
      %356 = vsyncadd [#allocation4], 0
      %s358 = sshll.u32 [#allocation13], 4
      %s359 = int_to_ptr.vmem [resolvable:$true] %s358
      %s360 = sshll.u32 %s7, 4
      %s361 = int_to_ptr.hbm [resolvable:$true] %s360
      %363 = dma.vmem_to_hbm [thread:$0]  %s359, 64, %s361, [#allocation4]
    $region57: #{tpu_custom_call.1} parent=1 // pred_fallthru
      _
    // Predicated region
    $region58: #{tpu_custom_call.1} parent=1 // pred_check
      _
    $region59: #{tpu_custom_call.1} parent=1 // pred_check_branch
      %365 = sbr.rel (0) target = $region61
    $region60: #{tpu_custom_call.1} parent=1 // pred_region
      %367 = dma.done [#allocation4], 64
    $region61: #{tpu_custom_call.1} parent=1 // pred_fallthru
      _
    %368 = vsyncpa [#allocation3], 1
    %369 = vsyncpa [#allocation6], 1
    %370 = vsyncpa [#allocation9], 1
    %371 = vsyncpa [#allocation12], 1
    %372 = vsyncpa [#allocation4], 1

</llo_original>
